<compile_context>
chip_gen: v6e
topology: v6e:2x2x1
jax: 0.10.0
libtpu: 0.0.40
codegen_flags: <defaults>
</compile_context>

<pallas_src>
from functools import partial

import jax
import jax.numpy as jnp
from jax import lax
from jax.experimental import pallas as pl
from jax.experimental.pallas import tpu as pltpu
import numpy as np


def _round_up(a, b):
    return (a + b - 1) // b * b


def _residual_vq_kernel(m_real, x_ref, cb_ref, cbsq_ref,
                        qout_ref, idx_ref, loss_ref):
    """One (token-tile i, quantizer q) grid step.

    x_ref    : (TM, Dp)  f32   tokens of this tile (resident across q)
    cb_ref   : (Cp, Dp)  f32   codebook of quantizer q (leading dim squeezed)
    cbsq_ref : (8, Cp)   f32   ||e_c||^2 (padded codes hold 1e30)
    qout_ref : (TM, Dp)  f32   accumulated quantization (resident across q)
    idx_ref  : (TM, Q)   i32   per-layer code indices for this tile
    loss_ref : (1, 8, Q) f32   per-tile, per-layer sum of squared errors
    """
    i = pl.program_id(0)
    q = pl.program_id(1)
    tm, _ = x_ref.shape
    cp = cb_ref.shape[0]

    @pl.when(q == 0)
    def _init():
        qout_ref[...] = jnp.zeros_like(qout_ref)
        idx_ref[...] = jnp.zeros_like(idx_ref)
        loss_ref[...] = jnp.zeros_like(loss_ref)

    # Current residual: x minus everything quantized so far (no extra scratch).
    r = x_ref[...] - qout_ref[...]                                # (TM, Dp) f32
    cb = cb_ref[...]                                              # (Cp, Dp) f32

    # argmin_c ||r - e_c||^2 == argmin_c (||e_c||^2 - 2 r.e_c); ||r||^2 is a
    # per-row constant and drops out of the argmin.  Fold -2 into the smaller
    # operand; score matmul in bf16 on the MXU with f32 accumulation.
    r2 = (-2.0 * r).astype(jnp.bfloat16)
    rd = lax.dot_general(r2, cb.astype(jnp.bfloat16),
                         (((1,), (1,)), ((), ())),
                         preferred_element_type=jnp.float32)      # (TM, Cp)
    cb_sq = cbsq_ref[0:1, :]                                      # (1, Cp)
    scores = cb_sq + rd                                           # (TM, Cp)

    # First-occurrence argmin (matches torch.argmin tie-breaking).
    min_s = jnp.min(scores, axis=-1, keepdims=True)               # (TM, 1)
    iota_c = lax.broadcasted_iota(jnp.int32, (tm, cp), 1)
    idx = jnp.min(jnp.where(scores <= min_s, iota_c, cp),
                  axis=-1, keepdims=True)                         # (TM, 1) i32

    # One-hot gather of the selected codebook rows through the MXU (f32).
    onehot = (iota_c == idx).astype(jnp.float32)                  # (TM, Cp)
    quantized = jnp.dot(onehot, cb,
                        preferred_element_type=jnp.float32)       # (TM, Dp)

    # Per-tile loss partial: sum over *valid* tokens of ||quantized - r||^2.
    # Padded lanes (D..Dp) are zero in both operands so they contribute 0.
    diff = quantized - r
    per_tok = jnp.sum(diff * diff, axis=-1, keepdims=True)        # (TM, 1)
    row = lax.broadcasted_iota(jnp.int32, (tm, 1), 0) + i * tm
    per_tok = jnp.where(row < m_real, per_tok, 0.0)
    tile_loss = jnp.sum(per_tok)

    # Accumulate quantized output; residual stays implicit (x - qout).
    qout_ref[...] = qout_ref[...] + quantized

    # Write this layer's indices / loss into column q of the small resident
    # per-tile blocks (lane dim == full Q keeps the BlockSpecs tile-legal).
    col_i = lax.broadcasted_iota(jnp.int32, idx_ref.shape, 1)
    idx_ref[...] = jnp.where(col_i == q, idx, idx_ref[...])
    col_l = lax.broadcasted_iota(jnp.int32, loss_ref.shape, 2)
    loss_ref[...] = jnp.where(col_l == q, tile_loss, loss_ref[...])


def residual_vq_forward(x, codebooks, *, tm=512):
    """x: (B, N, D) float, codebooks: (Q, C, D) float.

    Returns (quantized_out (B,N,D) f32, indices (B,N,Q) i32,
             num_expired (Q,) i32, losses (Q,) f32), matching the PyTorch
             ResidualVQ.forward stacking conventions (stack along dim=-1).
    """
    B, N, D = x.shape
    Q, C, _ = codebooks.shape
    M = B * N

    # Lane-align feature / codebook axes, sublane-align and tile the tokens.
    Dp = _round_up(D, 128)
    Cp = _round_up(C, 128)
    TM = min(tm, _round_up(M, 8))
    Mp = _round_up(M, TM)
    T = Mp // TM

    x2 = jnp.zeros((Mp, Dp), jnp.float32)
    x2 = x2.at[:M, :D].set(x.reshape(M, D).astype(jnp.float32))
    cb = jnp.zeros((Q, Cp, Dp), jnp.float32)
    cb = cb.at[:, :C, :D].set(codebooks.astype(jnp.float32))

    # ||e_c||^2 per quantizer; padded codes get a huge norm so the argmin can
    # never pick them.  Replicated over 8 sublanes to keep the block aligned.
    cb_sq = jnp.sum(cb * cb, axis=-1)                              # (Q, Cp)
    cb_sq = jnp.where(jnp.arange(Cp)[None, :] >= C, jnp.float32(1e30), cb_sq)
    cb_sq8 = jnp.broadcast_to(cb_sq[:, None, :], (Q, 8, Cp))

    # Explicit scoped-VMEM limit (defaults are only 16/32 MiB); headroom but
    # below v7x's 64 MiB physical VMEM per TensorCore.
    block_bytes = 4 * (2 * TM * Dp + 2 * TM * Dp + 2 * Cp * Dp +
                       2 * 8 * Cp + 2 * TM * 128 + 2 * 8 * 128)
    vmem_limit = int(min(max(4 * block_bytes, 32 << 20), 64 << 20))

    qout, idx, loss_part = pl.pallas_call(
        partial(_residual_vq_kernel, M),
        out_shape=(
            jax.ShapeDtypeStruct((Mp, Dp), jnp.float32),
            jax.ShapeDtypeStruct((Mp, Q), jnp.int32),
            jax.ShapeDtypeStruct((T, 8, Q), jnp.float32),
        ),
        grid_spec=pltpu.PrefetchScalarGridSpec(
            num_scalar_prefetch=0,
            grid=(T, Q),                       # token tiles x quantizers
            in_specs=[
                pl.BlockSpec((TM, Dp), lambda i, q: (i, 0)),
                # leading None == squeezed: kernel sees (Cp, Dp)
                pl.BlockSpec((None, Cp, Dp), lambda i, q: (q, 0, 0)),
                pl.BlockSpec((None, 8, Cp), lambda i, q: (q, 0, 0)),
            ],
            out_specs=[
                pl.BlockSpec((TM, Dp), lambda i, q: (i, 0)),
                pl.BlockSpec((TM, Q), lambda i, q: (i, 0)),
                pl.BlockSpec((1, 8, Q), lambda i, q: (i, 0, 0)),
            ],
        ),
        compiler_params=pltpu.CompilerParams(
            dimension_semantics=("parallel", "arbitrary"),
            vmem_limit_bytes=vmem_limit),
    )(x2, cb, cb_sq8)

    quantized_out = qout[:M, :D].reshape(B, N, D)
    indices = idx[:M, :].reshape(B, N, Q)
    losses = jnp.sum(loss_part[:, 0, :], axis=0) / jnp.float32(M * D)
    # TODO(synk): num_expired is only nonzero during EMA codebook updates
    # (training); the inference forward always reports 0 expired codes.
    num_expired = jnp.zeros((Q,), jnp.int32)
    return quantized_out, indices, num_expired, losses


def _reference(x, codebooks):
    """Pure-JAX reference mirroring the kernel numerics (bf16 score matmul)."""
    B, N, D = x.shape
    Q, C, _ = codebooks.shape
    M = B * N
    r = x.reshape(M, D).astype(jnp.float32)
    qout = jnp.zeros((M, D), jnp.float32)
    all_idx, all_loss = [], []
    for qi in range(Q):
        cb = codebooks[qi].astype(jnp.float32)
        cb_sq = jnp.sum(cb * cb, axis=-1)[None, :]
        rd = lax.dot_general((-2.0 * r).astype(jnp.bfloat16),
                             cb.astype(jnp.bfloat16),
                             (((1,), (1,)), ((), ())),
                             preferred_element_type=jnp.float32)
        scores = cb_sq + rd
        idx = jnp.argmin(scores, axis=-1)
        quantized = cb[idx]
        all_loss.append(jnp.mean((quantized - r) ** 2))
        all_idx.append(idx)
        r = r - quantized
        qout = qout + quantized
    return (qout.reshape(B, N, D),
            jnp.stack(all_idx, axis=-1).reshape(B, N, Q),
            jnp.zeros((Q,), jnp.int32),
            jnp.stack(all_loss, axis=-1))


if __name__ == "__main__":
    key = jax.random.PRNGKey(0)
    B, N, D = 2, 8, 32          # batch, sequence length, feature dim
    Q, C = 4, 64                # num_quantizers, codebook_size

    kx, kc = jax.random.split(key)
    x = jax.random.normal(kx, (B, N, D), dtype=jnp.float32)
    # deterministic synthetic codebooks (one per quantizer, not shared)
    codebooks = jax.random.normal(kc, (Q, C, D), dtype=jnp.float32)

    out = jax.block_until_ready(residual_vq_forward(x, codebooks))
    quantized_out, indices, num_expired, losses = out

    ref = _reference(x, codebooks)
    np.testing.assert_allclose(np.asarray(quantized_out), np.asarray(ref[0]),
                               rtol=1e-4, atol=1e-4)
    np.testing.assert_array_equal(np.asarray(indices), np.asarray(ref[1]))
    np.testing.assert_allclose(np.asarray(losses), np.asarray(ref[3]),
                               rtol=1e-4, atol=1e-4)

    print("KERNEL_OK")
</pallas_src>

<mosaic_0001>
module attributes {stable_mosaic.version = 11 : i64} {
  func.func @_residual_vq_kernel(%arg0: i32, %arg1: i32, %arg2: memref<16x128xf32, #tpu.memory_space<vmem>>, %arg3: memref<1x128x128xf32, #tpu.memory_space<vmem>>, %arg4: memref<1x8x128xf32, #tpu.memory_space<vmem>>, %arg5: memref<16x128xf32, #tpu.memory_space<vmem>>, %arg6: memref<16x4xi32, #tpu.memory_space<vmem>>, %arg7: memref<1x8x4xf32, #tpu.memory_space<vmem>>) attributes {dimension_semantics = [#tpu.dimension_semantics<parallel>, #tpu.dimension_semantics<arbitrary>], iteration_bounds = array<i64: 1, 4>, scalar_prefetch = 0 : i64, scratch_operands = 0 : i64, tpu.core_type = #tpu.core_type<tc>, window_params = [{transform_indices = @transform_0, window_bounds = array<i64: 16, 128>}, {transform_indices = @transform_1, window_bounds = array<i64: 1, 128, 128>}, {transform_indices = @transform_2, window_bounds = array<i64: 1, 8, 128>}, {transform_indices = @transform_3, window_bounds = array<i64: 16, 128>}, {transform_indices = @transform_4, window_bounds = array<i64: 16, 4>}, {transform_indices = @transform_5, window_bounds = array<i64: 1, 8, 4>}]} {
    %c0_i32 = arith.constant 0 : i32
    %0 = arith.cmpi eq, %arg1, %c0_i32 : i32
    %1 = arith.extui %0 : i1 to i32
    %c0_i32_0 = arith.constant 0 : i32
    %2 = arith.cmpi ne, %1, %c0_i32_0 : i32
    scf.if %2 {
      %cst_32 = arith.constant 0.000000e+00 : f32
      %65 = vector.broadcast %cst_32 : f32 to vector<16x128xf32>
      %c0_33 = arith.constant 0 : index
      %c0_34 = arith.constant 0 : index
      %66 = vector.load %arg5[%c0_33, %c0_34] : memref<16x128xf32, #tpu.memory_space<vmem>>, vector<16x128xf32>
      tpu.vector_store %arg5[%c0_33, %c0_34], %65 {strides = array<i32>} : memref<16x128xf32, #tpu.memory_space<vmem>>, vector<16x128xf32>,
      %c0_i32_35 = arith.constant 0 : i32
      %67 = vector.broadcast %c0_i32_35 : i32 to vector<16x4xi32>
      %c0_36 = arith.constant 0 : index
      %c0_37 = arith.constant 0 : index
      %68 = vector.load %arg6[%c0_36, %c0_37] : memref<16x4xi32, #tpu.memory_space<vmem>>, vector<16x4xi32>
      tpu.vector_store %arg6[%c0_36, %c0_37], %67 {strides = array<i32>} : memref<16x4xi32, #tpu.memory_space<vmem>>, vector<16x4xi32>,
      %cst_38 = arith.constant 0.000000e+00 : f32
      %69 = vector.broadcast %cst_38 : f32 to vector<1x8x4xf32>
      %c0_39 = arith.constant 0 : index
      %c0_40 = arith.constant 0 : index
      %c0_41 = arith.constant 0 : index
      %70 = vector.load %arg7[%c0_39, %c0_40, %c0_41] : memref<1x8x4xf32, #tpu.memory_space<vmem>>, vector<1x8x4xf32>
      tpu.vector_store %arg7[%c0_39, %c0_40, %c0_41], %69 {strides = array<i32>} : memref<1x8x4xf32, #tpu.memory_space<vmem>>, vector<1x8x4xf32>,
    } else {
    }
    %c0 = arith.constant 0 : index
    %c0_1 = arith.constant 0 : index
    %3 = vector.load %arg2[%c0, %c0_1] : memref<16x128xf32, #tpu.memory_space<vmem>>, vector<16x128xf32>
    %c0_2 = arith.constant 0 : index
    %c0_3 = arith.constant 0 : index
    %4 = vector.load %arg5[%c0_2, %c0_3] : memref<16x128xf32, #tpu.memory_space<vmem>>, vector<16x128xf32>
    %5 = arith.subf %3, %4 : vector<16x128xf32>
    %c0_4 = arith.constant 0 : index
    %c0_5 = arith.constant 0 : index
    %c0_6 = arith.constant 0 : index
    %6 = vector.load %arg3[%c0_4, %c0_5, %c0_6] : memref<1x128x128xf32, #tpu.memory_space<vmem>>, vector<1x128x128xf32>
    %7 = vector.shape_cast %6 : vector<1x128x128xf32> to vector<128x128xf32>
    %cst = arith.constant -2.000000e+00 : f32
    %8 = vector.broadcast %cst : f32 to vector<16x128xf32>
    %9 = arith.mulf %8, %5 : vector<16x128xf32>
    %10 = arith.truncf %9 : vector<16x128xf32> to vector<16x128xbf16>
    %11 = arith.truncf %7 : vector<128x128xf32> to vector<128x128xbf16>
    %cst_7 = arith.constant dense<0.000000e+00> : vector<16x128xf32>
    %12 = tpu.matmul %10, %11, %cst_7 {dimension_numbers = #tpu.dot_dimension_numbers<[1], [1], [0], [0], [0, 0, 1, 0], [], []>} : vector<16x128xbf16>, vector<128x128xbf16>, vector<16x128xf32> -> vector<16x128xf32>
    %c0_8 = arith.constant 0 : index
    %c0_9 = arith.constant 0 : index
    %c0_10 = arith.constant 0 : index
    %13 = vector.load %arg4[%c0_8, %c0_9, %c0_10] : memref<1x8x128xf32, #tpu.memory_space<vmem>>, vector<1x1x128xf32>
    %14 = vector.shape_cast %13 : vector<1x1x128xf32> to vector<1x128xf32>
    %15 = vector.broadcast %14 : vector<1x128xf32> to vector<16x128xf32>
    %16 = arith.addf %15, %12 : vector<16x128xf32>
    %cst_11 = arith.constant dense<0x7F800000> : vector<16xf32>
    %17 = vector.multi_reduction <minimumf>, %16, %cst_11 [1] : vector<16x128xf32> to vector<16xf32>
    %18 = vector.shape_cast %17 : vector<16xf32> to vector<16x1xf32>
    %19 = tpu.iota {dimensions = array<i32: 1>} : vector<16x128xi32>
    %20 = vector.broadcast %18 : vector<16x1xf32> to vector<16x128xf32>
    %21 = arith.cmpf ole, %16, %20 : vector<16x128xf32>
    %c128_i32 = arith.constant 128 : i32
    %22 = vector.broadcast %c128_i32 : i32 to vector<16x128xi32>
    %23 = arith.select %21, %19, %22 : vector<16x128xi1>, vector<16x128xi32>
    %cst_12 = arith.constant dense<2147483647> : vector<16xi32>
    %24 = vector.multi_reduction <minsi>, %23, %cst_12 [1] : vector<16x128xi32> to vector<16xi32>
    %25 = vector.shape_cast %24 : vector<16xi32> to vector<16x1xi32>
    %26 = vector.broadcast %25 : vector<16x1xi32> to vector<16x128xi32>
    %27 = arith.cmpi eq, %19, %26 : vector<16x128xi32>
    %28 = arith.extui %27 : vector<16x128xi1> to vector<16x128xi32>
    %29 = arith.sitofp %28 : vector<16x128xi32> to vector<16x128xf32>
    %cst_13 = arith.constant dense<0.000000e+00> : vector<16x128xf32>
    %30 = tpu.matmul %29, %7, %cst_13 {dimension_numbers = #tpu.dot_dimension_numbers<[1], [0], [0], [1], [0, 0, 1, 1], [], []>} : vector<16x128xf32>, vector<128x128xf32>, vector<16x128xf32> -> vector<16x128xf32>
    %31 = arith.subf %30, %5 : vector<16x128xf32>
    %32 = arith.mulf %31, %31 : vector<16x128xf32>
    %cst_14 = arith.constant dense<0.000000e+00> : vector<16xf32>
    %33 = vector.multi_reduction <add>, %32, %cst_14 [1] : vector<16x128xf32> to vector<16xf32>
    %34 = vector.shape_cast %33 : vector<16xf32> to vector<16x1xf32>
    %35 = tpu.iota {dimensions = array<i32: 0>} : vector<16x1xi32>
    %c16_i32 = arith.constant 16 : i32
    %36 = arith.muli %arg0, %c16_i32 : i32
    %37 = vector.broadcast %36 : i32 to vector<16x1xi32>
    %38 = arith.addi %35, %37 : vector<16x1xi32>
    %c16_i32_15 = arith.constant 16 : i32
    %39 = vector.broadcast %c16_i32_15 : i32 to vector<16x1xi32>
    %40 = arith.cmpi slt, %38, %39 : vector<16x1xi32>
    %cst_16 = arith.constant 0.000000e+00 : f32
    %41 = vector.broadcast %cst_16 : f32 to vector<16x1xf32>
    %42 = arith.select %40, %34, %41 : vector<16x1xi1>, vector<16x1xf32>
    %43 = vector.shape_cast %42 : vector<16x1xf32> to vector<1x16x1xf32>
    %cst_17 = arith.constant dense<0.000000e+00> : vector<1xf32>
    %44 = vector.multi_reduction <add>, %43, %cst_17 [1, 2] : vector<1x16x1xf32> to vector<1xf32>
    %45 = vector.shape_cast %44 : vector<1xf32> to vector<1x1x1xf32>
    %46 = vector.extract %45[0, 0, 0] : f32 from vector<1x1x1xf32>
    %c0_18 = arith.constant 0 : index
    %c0_19 = arith.constant 0 : index
    %47 = vector.load %arg5[%c0_18, %c0_19] : memref<16x128xf32, #tpu.memory_space<vmem>>, vector<16x128xf32>
    %48 = arith.addf %47, %30 : vector<16x128xf32>
    %c0_20 = arith.constant 0 : index
    %c0_21 = arith.constant 0 : index
    %49 = vector.load %arg5[%c0_20, %c0_21] : memref<16x128xf32, #tpu.memory_space<vmem>>, vector<16x128xf32>
    tpu.vector_store %arg5[%c0_20, %c0_21], %48 {strides = array<i32>} : memref<16x128xf32, #tpu.memory_space<vmem>>, vector<16x128xf32>,
    %50 = tpu.iota {dimensions = array<i32: 1>} : vector<16x4xi32>
    %51 = vector.broadcast %arg1 : i32 to vector<16x4xi32>
    %52 = arith.cmpi eq, %50, %51 : vector<16x4xi32>
    %c0_22 = arith.constant 0 : index
    %c0_23 = arith.constant 0 : index
    %53 = vector.load %arg6[%c0_22, %c0_23] : memref<16x4xi32, #tpu.memory_space<vmem>>, vector<16x4xi32>
    %54 = vector.shape_cast %25 : vector<16x1xi32> to vector<16x1xi32>
    %55 = vector.broadcast %54 : vector<16x1xi32> to vector<16x4xi32>
    %56 = arith.select %52, %55, %53 : vector<16x4xi1>, vector<16x4xi32>
    %c0_24 = arith.constant 0 : index
    %c0_25 = arith.constant 0 : index
    %57 = vector.load %arg6[%c0_24, %c0_25] : memref<16x4xi32, #tpu.memory_space<vmem>>, vector<16x4xi32>
    tpu.vector_store %arg6[%c0_24, %c0_25], %56 {strides = array<i32>} : memref<16x4xi32, #tpu.memory_space<vmem>>, vector<16x4xi32>,
    %58 = tpu.iota {dimensions = array<i32: 2>} : vector<1x8x4xi32>
    %59 = vector.broadcast %arg1 : i32 to vector<1x8x4xi32>
    %60 = arith.cmpi eq, %58, %59 : vector<1x8x4xi32>
    %c0_26 = arith.constant 0 : index
    %c0_27 = arith.constant 0 : index
    %c0_28 = arith.constant 0 : index
    %61 = vector.load %arg7[%c0_26, %c0_27, %c0_28] : memref<1x8x4xf32, #tpu.memory_space<vmem>>, vector<1x8x4xf32>
    %62 = vector.broadcast %46 : f32 to vector<1x8x4xf32>
    %63 = arith.select %60, %62, %61 : vector<1x8x4xi1>, vector<1x8x4xf32>
    %c0_29 = arith.constant 0 : index
    %c0_30 = arith.constant 0 : index
    %c0_31 = arith.constant 0 : index
    %64 = vector.load %arg7[%c0_29, %c0_30, %c0_31] : memref<1x8x4xf32, #tpu.memory_space<vmem>>, vector<1x8x4xf32>
    tpu.vector_store %arg7[%c0_29, %c0_30, %c0_31], %63 {strides = array<i32>} : memref<1x8x4xf32, #tpu.memory_space<vmem>>, vector<1x8x4xf32>,
    return
  }
  func.func @transform_0(%arg0: i32, %arg1: i32) -> (i32, i32) {
    %c0_i32 = arith.constant 0 : i32
    %c0_i32_0 = arith.constant 0 : i32
    return %arg0, %c0_i32 : i32, i32
  }
  func.func @transform_1(%arg0: i32, %arg1: i32) -> (i32, i32, i32) {
    %c0_i32 = arith.constant 0 : i32
    %c0_i32_0 = arith.constant 0 : i32
    %c0_i32_1 = arith.constant 0 : i32
    return %arg1, %c0_i32, %c0_i32_0 : i32, i32, i32
  }
  func.func @transform_2(%arg0: i32, %arg1: i32) -> (i32, i32, i32) {
    %c0_i32 = arith.constant 0 : i32
    %c0_i32_0 = arith.constant 0 : i32
    %c0_i32_1 = arith.constant 0 : i32
    return %arg1, %c0_i32, %c0_i32_0 : i32, i32, i32
  }
  func.func @transform_3(%arg0: i32, %arg1: i32) -> (i32, i32) {
    %c0_i32 = arith.constant 0 : i32
    %c0_i32_0 = arith.constant 0 : i32
    return %arg0, %c0_i32 : i32, i32
  }
  func.func @transform_4(%arg0: i32, %arg1: i32) -> (i32, i32) {
    %c0_i32 = arith.constant 0 : i32
    %c0_i32_0 = arith.constant 0 : i32
    return %arg0, %c0_i32 : i32, i32
  }
  func.func @transform_5(%arg0: i32, %arg1: i32) -> (i32, i32, i32) {
    %c0_i32 = arith.constant 0 : i32
    %c0_i32_0 = arith.constant 0 : i32
    %c0_i32_1 = arith.constant 0 : i32
    return %arg0, %c0_i32, %c0_i32_0 : i32, i32, i32
  }
}

</mosaic_0001>

<llo_original>
// kernel: tpu_custom_call.1
$region0: #{tpu_custom_call.1}
  #allocation0 [shape = 'u32[]', space=smem, size = 0x4, offset = 0x4, fixed_abs, tag = 'smem constant byte address 0x4 - core index']
  #allocation1 [shape = 'u32[144,128]{1,0:T(1,128)}', space=vmem, size = 0x12000, scoped, tag = 'internal scratch']
  %s0 = inlined_call_operand.hbm [shape: f32[16,128], index: 0, kind: input, shape index: {}]
  %s1 = inlined_call_operand.hbm [shape: f32[4,128,128], index: 1, kind: input, shape index: {}]
  %s2 = inlined_call_operand.hbm [shape: f32[4,8,128], index: 2, kind: input, shape index: {}]
  %s3 = inlined_call_operand.hbm [shape: f32[16,128], index: 3, kind: output, shape index: {0}]
  %s4 = inlined_call_operand.vmem [shape: s32[16,4], index: 4, kind: output, shape index: {1}]
  %s5 = inlined_call_operand.vmem [shape: f32[1,8,4], index: 5, kind: output, shape index: {2}]
  %6 = xla_tuple %s3, %s4, %s5
  %s7 = sld [smem:[#allocation0]]
  $region77: #{tpu_custom_call.1} parent=0
    _
  %s9 = ssub.s32 1, %s7
  %s10 = scalar_select 0, %s9, %s7
  $region1: #{tpu_custom_call.1} parent=0
    #allocation2 [shape = 'u8[8192]{0}', space=vmem, size = 0x2000, scoped, tag = 'input window, operand 0, single buffered']
    #allocation3 [shape = 's32[2]{0}', space=sflag, size = 0x8, scoped, tag = 'scoped memory for tpu_custom_call.1']
    #allocation4 [shape = 's32[2]{0}', space=sflag, size = 0x8, scoped, tag = 'scoped memory for tpu_custom_call.1']
    #allocation5 [shape = 'u8[131072]{0}', space=vmem, size = 0x20000, scoped, tag = 'input window, operand 1']
    #allocation6 [shape = 's32[2]{0}', space=sflag, size = 0x8, scoped, tag = 'scoped memory for tpu_custom_call.1']
    #allocation7 [shape = 'u8[8192]{0}', space=vmem, size = 0x2000, scoped, tag = 'input window, operand 2']
    #allocation8 [shape = 'u8[8192]{0}', space=vmem, size = 0x2000, scoped, tag = 'output window, operand 0, single buffered']
    %11 = vsyncpa [#allocation3], 0
    %12 = vsyncpa [#allocation6], 0
    %s13 = scalar_lea.sflag [#allocation6], 1
    %14 = vsyncpa %s13, 0
    %15 = vsyncpa [#allocation4], 0
    loop: start=0, step=1, limit=6
    $region2: #{tpu_custom_call.1} parent=1 // loop_pre_header
      _
    $region3: #{tpu_custom_call.1} parent=1 // loop_header
      %s17 = sphi 0, %s21
      %p18 = scmp.ge.s32.totalorder %s17, 6
      %s24 = sphi 0, %s36
      %s25 = sphi 0, %s32
      %s26 = sphi 0, %s24
      %s27 = sphi 0, %s25
      %s28 = sphi 0, %s26
      %s29 = sphi 0, %s27
      %s39 = sphi 0, %s41
      %s42 = sphi 0, %s39
      %s43 = sphi 0, %s42
      %s59 = sphi 0, %s43
      %s65 = sphi 0, %s67
      %s68 = sphi 0, %s65
      %s69 = sphi 0, %s68
      %s85 = sphi 0, %s69
      %s91 = sphi 0, %s93
      %s94 = sphi 0, %s91
      %s95 = sphi 0, %s94
      %s111 = sphi 0, %s95
      %s117 = sphi 0, %s119
      %s120 = sphi 0, %s117
      %s121 = sphi 0, %s120
      %s137 = sphi 0, %s121
      %s143 = sphi 0, %s145
      %s146 = sphi 0, %s143
      %s147 = sphi 0, %s146
      %s163 = sphi 0, %s147
      %s169 = sphi 0, %s171
      %s172 = sphi 0, %s169
      %s173 = sphi 0, %s172
      %s189 = sphi 0, %s173
    $region4: #{tpu_custom_call.1} parent=1 // loop_header_branch
      %20 = sbr.rel (%p18) target = $region8
    $region5: #{tpu_custom_call.1} parent=1 // loop_body
      %s22 = ssub.s32 %s17, 1
      %s23 = ssub.s32 %s17, 2
      %s30 = sadd.s32 1, %s25
      %p31 = scmp.ge.s32.totalorder %s30, 4
      %s32 = scalar_select %p31, 0, %s30
      %s33 = sadd.s32 1, %s24
      %s34 = scalar_select %p31, %s33, %s24
      %p35 = scmp.ge.s32.totalorder %s34, 1
      %s36 = scalar_select %p35, 0, %s34
      %s37 = ssub.s32 %s24, %s36
      %p38 = scmp.eq.s32.totalorder %s37, 0
      %s40 = sadd.s32 %s39, 1
      %s41 = scalar_select %p38, %s39, %s40
      %p44 = pneg %p38
      %p45 = scmp.eq.s32.totalorder %s17, 3
      %p46 = por %p44, %p45
      %p47 = scmp.ne.s32.totalorder %s39, %s42
      %p48 = scmp.eq.s32.totalorder %s17, 0
      %p49 = por %p47, %p48
      %p50 = scmp.ne.s32.totalorder %s39, %s42
      %p51 = scmp.eq.s32.totalorder %s22, 3
      %p52 = por %p50, %p51
      %p53 = scmp.ne.s32.totalorder %s42, %s43
      %p54 = scmp.eq.s32.totalorder %s22, 0
      %p55 = por %p53, %p54
      %p56 = scmp.ne.s32.totalorder %s42, %s43
      %p57 = scmp.eq.s32.totalorder %s23, 3
      %p58 = por %p56, %p57
      %p60 = scmp.ne.s32.totalorder %s43, %s59
      %p61 = scmp.eq.s32.totalorder %s23, 0
      %p62 = por %p60, %p61
      %s63 = ssub.s32 %s25, %s32
      %p64 = scmp.eq.s32.totalorder %s63, 0
      %s66 = sadd.s32 %s65, 1
      %s67 = scalar_select %p64, %s65, %s66
      %p70 = pneg %p64
      %p71 = scmp.eq.s32.totalorder %s17, 3
      %p72 = por %p70, %p71
      %p73 = scmp.ne.s32.totalorder %s65, %s68
      %p74 = scmp.eq.s32.totalorder %s17, 0
      %p75 = por %p73, %p74
      %p76 = scmp.ne.s32.totalorder %s65, %s68
      %p77 = scmp.eq.s32.totalorder %s22, 3
      %p78 = por %p76, %p77
      %p79 = scmp.ne.s32.totalorder %s68, %s69
      %p80 = scmp.eq.s32.totalorder %s22, 0
      %p81 = por %p79, %p80
      %p82 = scmp.ne.s32.totalorder %s68, %s69
      %p83 = scmp.eq.s32.totalorder %s23, 3
      %p84 = por %p82, %p83
      %p86 = scmp.ne.s32.totalorder %s69, %s85
      %p87 = scmp.eq.s32.totalorder %s23, 0
      %p88 = por %p86, %p87
      %s89 = ssub.s32 %s25, %s32
      %p90 = scmp.eq.s32.totalorder %s89, 0
      %s92 = sadd.s32 %s91, 1
      %s93 = scalar_select %p90, %s91, %s92
      %p96 = pneg %p90
      %p97 = scmp.eq.s32.totalorder %s17, 3
      %p98 = por %p96, %p97
      %p99 = scmp.ne.s32.totalorder %s91, %s94
      %p100 = scmp.eq.s32.totalorder %s17, 0
      %p101 = por %p99, %p100
      %p102 = scmp.ne.s32.totalorder %s91, %s94
      %p103 = scmp.eq.s32.totalorder %s22, 3
      %p104 = por %p102, %p103
      %p105 = scmp.ne.s32.totalorder %s94, %s95
      %p106 = scmp.eq.s32.totalorder %s22, 0
      %p107 = por %p105, %p106
      %p108 = scmp.ne.s32.totalorder %s94, %s95
      %p109 = scmp.eq.s32.totalorder %s23, 3
      %p110 = por %p108, %p109
      %p112 = scmp.ne.s32.totalorder %s95, %s111
      %p113 = scmp.eq.s32.totalorder %s23, 0
      %p114 = por %p112, %p113
      %s115 = ssub.s32 %s24, %s36
      %p116 = scmp.eq.s32.totalorder %s115, 0
      %s118 = sadd.s32 %s117, 1
      %s119 = scalar_select %p116, %s117, %s118
      %p122 = pneg %p116
      %p123 = scmp.eq.s32.totalorder %s17, 3
      %p124 = por %p122, %p123
      %p125 = scmp.ne.s32.totalorder %s117, %s120
      %p126 = scmp.eq.s32.totalorder %s17, 0
      %p127 = por %p125, %p126
      %p128 = scmp.ne.s32.totalorder %s117, %s120
      %p129 = scmp.eq.s32.totalorder %s22, 3
      %p130 = por %p128, %p129
      %p131 = scmp.ne.s32.totalorder %s120, %s121
      %p132 = scmp.eq.s32.totalorder %s22, 0
      %p133 = por %p131, %p132
      %p134 = scmp.ne.s32.totalorder %s120, %s121
      %p135 = scmp.eq.s32.totalorder %s23, 3
      %p136 = por %p134, %p135
      %p138 = scmp.ne.s32.totalorder %s121, %s137
      %p139 = scmp.eq.s32.totalorder %s23, 0
      %p140 = por %p138, %p139
      %s141 = ssub.s32 %s24, %s36
      %p142 = scmp.eq.s32.totalorder %s141, 0
      %s144 = sadd.s32 %s143, 1
      %s145 = scalar_select %p142, %s143, %s144
      %p148 = pneg %p142
      %p149 = scmp.eq.s32.totalorder %s17, 3
      %p150 = por %p148, %p149
      %p151 = scmp.ne.s32.totalorder %s143, %s146
      %p152 = scmp.eq.s32.totalorder %s17, 0
      %p153 = por %p151, %p152
      %p154 = scmp.ne.s32.totalorder %s143, %s146
      %p155 = scmp.eq.s32.totalorder %s22, 3
      %p156 = por %p154, %p155
      %p157 = scmp.ne.s32.totalorder %s146, %s147
      %p158 = scmp.eq.s32.totalorder %s22, 0
      %p159 = por %p157, %p158
      %p160 = scmp.ne.s32.totalorder %s146, %s147
      %p161 = scmp.eq.s32.totalorder %s23, 3
      %p162 = por %p160, %p161
      %p164 = scmp.ne.s32.totalorder %s147, %s163
      %p165 = scmp.eq.s32.totalorder %s23, 0
      %p166 = por %p164, %p165
      %s167 = ssub.s32 %s24, %s36
      %p168 = scmp.eq.s32.totalorder %s167, 0
      %s170 = sadd.s32 %s169, 1
      %s171 = scalar_select %p168, %s169, %s170
      %p174 = pneg %p168
      %p175 = scmp.eq.s32.totalorder %s17, 3
      %p176 = por %p174, %p175
      %p177 = scmp.ne.s32.totalorder %s169, %s172
      %p178 = scmp.eq.s32.totalorder %s17, 0
      %p179 = por %p177, %p178
      %p180 = scmp.ne.s32.totalorder %s169, %s172
      %p181 = scmp.eq.s32.totalorder %s22, 3
      %p182 = por %p180, %p181
      %p183 = scmp.ne.s32.totalorder %s172, %s173
      %p184 = scmp.eq.s32.totalorder %s22, 0
      %p185 = por %p183, %p184
      %p186 = scmp.ne.s32.totalorder %s172, %s173
      %p187 = scmp.eq.s32.totalorder %s23, 3
      %p188 = por %p186, %p187
      %p190 = scmp.ne.s32.totalorder %s173, %s189
      %p191 = scmp.eq.s32.totalorder %s23, 0
      %p192 = por %p190, %p191
      %p193 = scmp.le.s32.totalorder 1, %s17
      %p194 = scmp.lt.s32.totalorder %s17, 5
      %p195 = pnand %p193, %p194
      %p196 = pneg %p195
      // Predicated region
      $region9: #{tpu_custom_call.1} parent=5 // pred_check
        _
      $region10: #{tpu_custom_call.1} parent=5 // pred_check_branch
        %198 = sbr.rel (%p195) target = $region12
      $region11: #{tpu_custom_call.1} parent=5 // pred_region
        %s199 = ssub.s32 %s17, 1
        // Predicated region
        $region13: #{tpu_custom_call.1} parent=11 // pred_check
          %p200 = pneg %p55
        $region14: #{tpu_custom_call.1} parent=11 // pred_check_branch
          %202 = sbr.rel (%p200) target = $region16
        $region15: #{tpu_custom_call.1} parent=11 // pred_region
          %s203 = smul.u32 2, %s26
          %s205 = ssub.s32 256, 256
          %206 = vsyncadd [#allocation3], %s205
          %s207 = smul.addr %s203, 128
          %s208 = scalar_lea.hbm %s0, %s207
          %s209 = sshll.u32 [#allocation2], 4
          %s210 = int_to_ptr.vmem [resolvable:$true] %s209
          %215 = dma.hbm_to_vmem [thread:$0]  %s208, 256, %s210, [#allocation3], 128, 128, 8
        $region16: #{tpu_custom_call.1} parent=11 // pred_fallthru
          _
      $region12: #{tpu_custom_call.1} parent=5 // pred_fallthru
        _
      %p216 = scmp.lt.s32.totalorder %s17, 4
      // Predicated region
      $region17: #{tpu_custom_call.1} parent=5 // pred_check
        %p217 = pneg %p216
      $region18: #{tpu_custom_call.1} parent=5 // pred_check_branch
        %219 = sbr.rel (%p217) target = $region20
      $region19: #{tpu_custom_call.1} parent=5 // pred_region
        // Predicated region
        $region21: #{tpu_custom_call.1} parent=19 // pred_check
          %p220 = pneg %p75
        $region22: #{tpu_custom_call.1} parent=19 // pred_check_branch
          %222 = sbr.rel (%p220) target = $region24
        $region23: #{tpu_custom_call.1} parent=19 // pred_region
          %s223 = sand.u32 %s17, 1
          %s224 = scalar_lea.sflag [#allocation6], %s223
          %s225 = sand.u32 %s65, 1
          %s226 = smul.addr %s225, 128
          %s227 = scalar_lea.vmem [#allocation5], %s226
          %s229 = ssub.s32 2048, 2048
          %230 = vsyncadd %s224, %s229
          %s231 = smul.addr %s25, 16
          %s232 = smul.addr %s231, 128
          %s233 = scalar_lea.hbm %s1, %s232
          %s234 = sshll.u32 %s227, 4
          %s235 = int_to_ptr.vmem [resolvable:$true] %s234
          %240 = dma.hbm_to_vmem [thread:$0]  %s233, 2048, %s235, %s224, 128, 128, 8
        $region24: #{tpu_custom_call.1} parent=19 // pred_fallthru
          _
        // Predicated region
        $region25: #{tpu_custom_call.1} parent=19 // pred_check
          %p241 = pneg %p101
        $region26: #{tpu_custom_call.1} parent=19 // pred_check_branch
          %243 = sbr.rel (%p241) target = $region28
        $region27: #{tpu_custom_call.1} parent=19 // pred_region
          %s244 = sand.u32 %s17, 1
          %s245 = scalar_lea.sflag [#allocation6], %s244
          %s246 = sand.u32 %s91, 1
          %s247 = smul.addr %s246, 8
          %s248 = scalar_lea.vmem [#allocation7], %s247
          %s250 = ssub.s32 128, 128
          %251 = vsyncadd %s245, %s250
          %s252 = smul.addr %s25, 128
          %s253 = scalar_lea.hbm %s2, %s252
          %s255 = sshll.u32 %s248, 4
          %s256 = int_to_ptr.vmem [resolvable:$true] %s255
          %258 = dma.hbm_to_vmem [thread:$0]  %s253, 128, %s256, %s245
        $region28: #{tpu_custom_call.1} parent=19 // pred_fallthru
          _
      $region20: #{tpu_custom_call.1} parent=5 // pred_fallthru
        _
      %p259 = scmp.le.s32.totalorder 1, %s17
      %p260 = scmp.lt.s32.totalorder %s17, 5
      %p261 = pnand %p259, %p260
      %p262 = pneg %p261
      // Predicated region
      $region29: #{tpu_custom_call.1} parent=5 // pred_check
        _
      $region30: #{tpu_custom_call.1} parent=5 // pred_check_branch
        %264 = sbr.rel (%p261) target = $region32
      $region31: #{tpu_custom_call.1} parent=5 // pred_region
        %s265 = ssub.s32 %s17, 1
        // Predicated region
        $region33: #{tpu_custom_call.1} parent=31 // pred_check
          %p266 = pneg %p55
        $region34: #{tpu_custom_call.1} parent=31 // pred_check_branch
          %268 = sbr.rel (%p266) target = $region36
        $region35: #{tpu_custom_call.1} parent=31 // pred_region
          %269 = dma.done [#allocation3], 256
        $region36: #{tpu_custom_call.1} parent=31 // pred_fallthru
          _
        %s270 = sand.u32 %s22, 1
        %s271 = scalar_lea.sflag [#allocation6], %s270
        %s272 = sand.u32 %s68, 1
        %s273 = smul.addr %s272, 128
        %s274 = scalar_lea.vmem [#allocation5], %s273
        // Predicated region
        $region37: #{tpu_custom_call.1} parent=31 // pred_check
          %p275 = pneg %p81
        $region38: #{tpu_custom_call.1} parent=31 // pred_check_branch
          %277 = sbr.rel (%p275) target = $region40
        $region39: #{tpu_custom_call.1} parent=31 // pred_region
          %278 = dma.done %s271, 2048
        $region40: #{tpu_custom_call.1} parent=31 // pred_fallthru
          _
        %s279 = sand.u32 %s22, 1
        %s280 = scalar_lea.sflag [#allocation6], %s279
        %s281 = sand.u32 %s94, 1
        %s282 = smul.addr %s281, 8
        %s283 = scalar_lea.vmem [#allocation7], %s282
        // Predicated region
        $region41: #{tpu_custom_call.1} parent=31 // pred_check
          %p284 = pneg %p107
        $region42: #{tpu_custom_call.1} parent=31 // pred_check_branch
          %286 = sbr.rel (%p284) target = $region44
        $region43: #{tpu_custom_call.1} parent=31 // pred_region
          %287 = dma.done %s280, 128
        $region44: #{tpu_custom_call.1} parent=31 // pred_fallthru
          _
        %p288 = pneg %p55
        %p289 = pneg %p52
        %s290 = sand.u32 %s22, 1
        %s291 = scalar_lea.sflag [#allocation6], %s290
        %s292 = sand.u32 %s68, 1
        %s293 = smul.addr %s292, 128
        %s294 = scalar_lea.vmem [#allocation5], %s293
        %p295 = pneg %p81
        %p296 = pneg %p78
        %s297 = sand.u32 %s22, 1
        %s298 = scalar_lea.sflag [#allocation6], %s297
        %s299 = sand.u32 %s94, 1
        %s300 = smul.addr %s299, 8
        %s301 = scalar_lea.vmem [#allocation7], %s300
        %p302 = pneg %p107
        %p303 = pneg %p104
        %p304 = pneg %p133
        %p305 = pneg %p130
        %p306 = pneg %p159
        %p307 = pneg %p156
        %s308 = smul.u32 2, %s26
        %p309 = scmp.lt.s32.totalorder %s308, 1
        %s310 = scalar_select %p309, %s308, 1
        %s311 = smul.addr %s310, 8
        %s312 = scalar_lea.vmem %s4, %s311
        %p313 = pneg %p185
        %p314 = pneg %p182
        %p315 = scmp.lt.s32.totalorder %s26, 0
        %s316 = scalar_select %p315, %s26, 0
        %s317 = smul.addr %s316, 8
        %s318 = scalar_lea.vmem %s5, %s317
        %s319 = smul.u32 2, %s26
        %s320 = smul.u32 2, %s26
        %s321 = smul.u32 2, %s26
        %p322 = scmp.lt.s32.totalorder %s321, 1
        %s323 = scalar_select %p322, %s321, 1
        %s324 = smul.addr %s323, 8
        %s325 = scalar_lea.vmem %s4, %s324
        %s326 = smul.u32 2, %s26
        %p327 = scmp.lt.s32.totalorder %s26, 0
        %s328 = scalar_select %p327, %s26, 0
        %s329 = smul.addr %s328, 8
        %s330 = scalar_lea.vmem %s5, %s329
        %p332 = scmp.eq.s32.totalorder %s27, 0
        // Predicated region
        $region45: #{tpu_custom_call.1} parent=31 // pred_check
          %p333 = pneg %p332
        $region46: #{tpu_custom_call.1} parent=31 // pred_check_branch
          %335 = sbr.rel (%p333) target = $region48
        $region47: #{tpu_custom_call.1} parent=31 // pred_region
          %336 = vst [vmem:[#allocation8] sm:$0xff] 0.0
          %337 = vst [vmem:[#allocation8 + $0x8] sm:$0xff] 0.0
          %vm338 = vcmask 31744
          %339 = vst.msk [vmem:[%s325] sm:$0xff] %vm338, 0
          %340 = vst.msk [vmem:[%s325 + $0x8] sm:$0xff] %vm338, 0
          %341 = vst.msk [vmem:[%s330] sm:$0xff] %vm338, 0.0
        $region48: #{tpu_custom_call.1} parent=31 // pred_fallthru
          _
        %v342 = vld [vmem:[#allocation2] sm:$0xff]
        %v343 = vld [vmem:[#allocation2 + $0x8] sm:$0xff]
        %v344 = vld [vmem:[#allocation8] sm:$0xff]
        %v345 = vld [vmem:[#allocation8 + $0x8] sm:$0xff]
        %v346 = vsub.f32 %v342, %v344
        %v347 = vsub.f32 %v343, %v345
        %v348 = vld [vmem:[%s274] sm:$0xff]
        %v349 = vld [vmem:[%s274 + $0x8] sm:$0xff]
        %v350 = vld [vmem:[%s274 + $0x10] sm:$0xff]
        %v351 = vld [vmem:[%s274 + $0x18] sm:$0xff]
        %v352 = vld [vmem:[%s274 + $0x20] sm:$0xff]
        %v353 = vld [vmem:[%s274 + $0x28] sm:$0xff]
        %v354 = vld [vmem:[%s274 + $0x30] sm:$0xff]
        %v355 = vld [vmem:[%s274 + $0x38] sm:$0xff]
        %v356 = vld [vmem:[%s274 + $0x40] sm:$0xff]
        %v357 = vld [vmem:[%s274 + $0x48] sm:$0xff]
        %v358 = vld [vmem:[%s274 + $0x50] sm:$0xff]
        %v359 = vld [vmem:[%s274 + $0x58] sm:$0xff]
        %v360 = vld [vmem:[%s274 + $0x60] sm:$0xff]
        %v361 = vld [vmem:[%s274 + $0x68] sm:$0xff]
        %v362 = vld [vmem:[%s274 + $0x70] sm:$0xff]
        %v363 = vld [vmem:[%s274 + $0x78] sm:$0xff]
        %v364 = vmul.f32 %v346, -2.0
        %v365 = vmul.f32 %v347, -2.0
        %v366 = vpack.c.bf16 %v365, %v364
        %v367 = vpack.c.bf16 %v349, %v348
        %v368 = vpack.c.bf16 %v351, %v350
        %v369 = vpack.c.bf16 %v353, %v352
        %v370 = vpack.c.bf16 %v355, %v354
        %v371 = vpack.c.bf16 %v357, %v356
        %v372 = vpack.c.bf16 %v359, %v358
        %v373 = vpack.c.bf16 %v361, %v360
        %v374 = vpack.c.bf16 %v363, %v362
        %375 = vmatprep.subr.bf16.mxu0 0
        %376 = vmatpush1.bf16.xpose.msra.mxu0 %v374
        %377 = vmatprep.subr.bf16.mxu0 0
        %378 = vmatpush1.bf16.xpose.msra.mxu0 %v373
        %379 = vmatprep.subr.bf16.mxu0 0
        %380 = vmatpush1.bf16.xpose.msra.mxu0 %v372
        %381 = vmatprep.subr.bf16.mxu0 0
        %382 = vmatpush1.bf16.xpose.msra.mxu0 %v371
        %383 = vmatprep.subr.bf16.mxu0 0
        %384 = vmatpush1.bf16.xpose.msra.mxu0 %v370
        %385 = vmatprep.subr.bf16.mxu0 0
        %386 = vmatpush1.bf16.xpose.msra.mxu0 %v369
        %387 = vmatprep.subr.bf16.mxu0 0
        %388 = vmatpush1.bf16.xpose.msra.mxu0 %v368
        %389 = vmatprep.subr.bf16.mxu0 0
        %390 = vmatpush1.bf16.xpose.msra.mxu0 %v367
        %391 = vmatprep.subr.bf16.mxu0 0
        %392 = vmatpush2.bf16.xpose.msra.mxu0 0
        %393 = vmatprep.subr.bf16.mxu0 0
        %394 = vmatpush2.bf16.xpose.msra.mxu0 0
        %395 = vmatprep.subr.bf16.mxu0 0
        %396 = vmatpush2.bf16.xpose.msra.mxu0 0
        %397 = vmatprep.subr.bf16.mxu0 0
        %398 = vmatpush2.bf16.xpose.msra.mxu0 0
        %399 = vmatprep.subr.bf16.mxu0 0
        %400 = vmatpush2.bf16.xpose.msra.mxu0 0
        %401 = vmatprep.subr.bf16.mxu0 0
        %402 = vmatpush2.bf16.xpose.msra.mxu0 0
        %403 = vmatprep.subr.bf16.mxu0 0
        %404 = vmatpush2.bf16.xpose.msra.mxu0 0
        %405 = vmatprep.subr.bf16.mxu0 0
        %406 = vmatpush2.bf16.xpose.msra.mxu0 0
        %407 = vmatprep.mubr.bf16.mxu0 0
        %408 = vmatmul.mubr.bf16.gmra.mxu0 %v366
        %v409 = vpop.f32.mrf.mxu0
        %v410 = vadd.f32 0.0, %v409
        %v411 = vpop.f32.mrf.mxu0
        %v412 = vpop.f32.mrf.mxu0
        %v413 = vadd.f32 0.0, %v412
        %v414 = vpop.f32.mrf.mxu0
        %415 = vdwg.mxu0
        %v416 = vld [vmem:[%s283] sm:$0x1]
        %v417 = vlaneseq
        %v418 = vshrl.u32 %v417, 7
        %v419 = vsub.s32 0, %v418
        %v420 = vrot.slane %v416, %v419
        %v421 = vadd.f32 %v420, %v410
        %v422 = vadd.f32 %v420, %v413
        %423 = vmin.xlane.f32.xlu0 %v421
        %v424 = vpop.xlane.xlu0 %423
        %425 = vmin.xlane.f32.xlu0 %v422
        %v426 = vpop.xlane.xlu0 %425
        %v427 = vlaneseq
        %v428 = vand.u32 %v427, 127
        %vm429 = vcmp.le.f32.partialorder %v421, %v424
        %vm430 = vcmp.le.f32.partialorder %v422, %v426
        %v431 = vsel %vm429, %v428, 128
        %v432 = vsel %vm430, %v428, 128
        %v433 = vand.u32 %v431, 65535
        %v434 = vshra.s32 %v431, 16
        %v435 = vcvt.s32.f32 %v433
        %v436 = vcvt.s32.f32 %v434
        %437 = vmin.xlane.f32.xlu0 %v436
        %v438 = vpop.xlane.xlu0 %437
        %vm439 = vcmp.eq.f32.partialorder %v436, %v438
        %v440 = vsel %vm439, %v435, inf
        %441 = vmin.xlane.f32.xlu0 %v440
        %v442 = vpop.xlane.xlu0 %441
        %v443 = vcvt.f32.s32 %v442
        %v444 = vcvt.f32.s32 %v438
        %v445 = vshll.u32 %v444, 16
        %v446 = vadd.s32 %v445, %v443
        %v447 = vand.u32 %v432, 65535
        %v448 = vshra.s32 %v432, 16
        %v449 = vcvt.s32.f32 %v447
        %v450 = vcvt.s32.f32 %v448
        %451 = vmin.xlane.f32.xlu0 %v450
        %v452 = vpop.xlane.xlu0 %451
        %vm453 = vcmp.eq.f32.partialorder %v450, %v452
        %v454 = vsel %vm453, %v449, inf
        %455 = vmin.xlane.f32.xlu0 %v454
        %v456 = vpop.xlane.xlu0 %455
        %v457 = vcvt.f32.s32 %v456
        %v458 = vcvt.f32.s32 %v452
        %v459 = vshll.u32 %v458, 16
        %v460 = vadd.s32 %v459, %v457
        %vm461 = vcmp.eq.s32.totalorder %v428, %v446
        %vm462 = vcmp.eq.s32.totalorder %v428, %v460
        %v463 = vsel %vm461, 1, 0
        %v464 = vsel %vm462, 1, 0
        %v465 = vcvt.s32.f32 %v463
        %v466 = vcvt.s32.f32 %v464
        %467 = vmatprep.subr.mxu0 0.0
        %468 = vmatpush1.msra.mxu0 %v363
        %469 = vmatprep.subr.mxu0 0.0
        %470 = vmatpush1.msra.mxu0 %v362
        %471 = vmatprep.subr.mxu0 0.0
        %472 = vmatpush1.msra.mxu0 %v361
        %473 = vmatprep.subr.mxu0 0.0
        %474 = vmatpush1.msra.mxu0 %v360
        %475 = vmatprep.subr.mxu0 0.0
        %476 = vmatpush1.msra.mxu0 %v359
        %477 = vmatprep.subr.mxu0 0.0
        %478 = vmatpush1.msra.mxu0 %v358
        %479 = vmatprep.subr.mxu0 0.0
        %480 = vmatpush1.msra.mxu0 %v357
        %481 = vmatprep.subr.mxu0 0.0
        %482 = vmatpush1.msra.mxu0 %v356
        %483 = vmatprep.subr.mxu0 0.0
        %484 = vmatpush1.msra.mxu0 %v355
        %485 = vmatprep.subr.mxu0 0.0
        %486 = vmatpush1.msra.mxu0 %v354
        %487 = vmatprep.subr.mxu0 0.0
        %488 = vmatpush1.msra.mxu0 %v353
        %489 = vmatprep.subr.mxu0 0.0
        %490 = vmatpush1.msra.mxu0 %v352
        %491 = vmatprep.subr.mxu0 0.0
        %492 = vmatpush1.msra.mxu0 %v351
        %493 = vmatprep.subr.mxu0 0.0
        %494 = vmatpush1.msra.mxu0 %v350
        %495 = vmatprep.subr.mxu0 0.0
        %496 = vmatpush1.msra.mxu0 %v349
        %497 = vmatprep.subr.mxu0 0.0
        %498 = vmatpush1.msra.mxu0 %v348
        %499 = vmatprep.subr.mxu0 0.0
        %500 = vmatpush2.msra.mxu0 0.0
        %501 = vmatprep.subr.mxu0 0.0
        %502 = vmatpush2.msra.mxu0 0.0
        %503 = vmatprep.subr.mxu0 0.0
        %504 = vmatpush2.msra.mxu0 0.0
        %505 = vmatprep.subr.mxu0 0.0
        %506 = vmatpush2.msra.mxu0 0.0
        %507 = vmatprep.subr.mxu0 0.0
        %508 = vmatpush2.msra.mxu0 0.0
        %509 = vmatprep.subr.mxu0 0.0
        %510 = vmatpush2.msra.mxu0 0.0
        %511 = vmatprep.subr.mxu0 0.0
        %512 = vmatpush2.msra.mxu0 0.0
        %513 = vmatprep.subr.mxu0 0.0
        %514 = vmatpush2.msra.mxu0 0.0
        %515 = vmatprep.subr.mxu0 0.0
        %516 = vmatpush2.msra.mxu0 0.0
        %517 = vmatprep.subr.mxu0 0.0
        %518 = vmatpush2.msra.mxu0 0.0
        %519 = vmatprep.subr.mxu0 0.0
        %520 = vmatpush2.msra.mxu0 0.0
        %521 = vmatprep.subr.mxu0 0.0
        %522 = vmatpush2.msra.mxu0 0.0
        %523 = vmatprep.subr.mxu0 0.0
        %524 = vmatpush2.msra.mxu0 0.0
        %525 = vmatprep.subr.mxu0 0.0
        %526 = vmatpush2.msra.mxu0 0.0
        %527 = vmatprep.subr.mxu0 0.0
        %528 = vmatpush2.msra.mxu0 0.0
        %529 = vmatprep.subr.mxu0 0.0
        %530 = vmatpush2.msra.mxu0 0.0
        %531 = vmatprep.mubr.f32.mxu0 0.0
        %532 = vmatmul.mubr.f32.gmra.mxu0 %v465
        %v533 = vpop.f32.mrf.mxu0
        %v534 = vadd.f32 0.0, %v533
        %v535 = vpop.f32.mrf.mxu0
        %536 = vmatprep.mubr.f32.mxu0 0.0
        %537 = vmatmul.mubr.f32.gmra.mxu0 %v466
        %v538 = vpop.f32.mrf.mxu0
        %v539 = vadd.f32 0.0, %v538
        %v540 = vpop.f32.mrf.mxu0
        %541 = vdwg.mxu0
        %v542 = vsub.f32 %v534, %v346
        %v543 = vsub.f32 %v539, %v347
        %v544 = vmul.f32 %v542, %v542
        %v545 = vmul.f32 %v543, %v543
        %546 = vadd.xlane.f32.xlu0 %v544
        %v547 = vpop.xlane.xlu0 %546
        %548 = vadd.xlane.f32.xlu0 %v545
        %v549 = vpop.xlane.xlu0 %548
        %v550 = vlaneseq
        %v551 = vshrl.u32 %v550, 7
        %v552 = vadd.s32 %v551, 8
        %s553 = smul.u32 %s26, 16
        %v554 = vstv %s553
        %v555 = vadd.s32 %v551, %v554
        %v556 = vadd.s32 %v552, %v554
        %vm557 = vcmp.lt.s32.totalorder %v555, 16
        %vm558 = vcmp.lt.s32.totalorder %v556, 16
        %v559 = vsel %vm557, %v547, 0.0
        %v560 = vsel %vm558, %v549, 0.0
        %vm561 = vcmask 7168
        %v562 = vsel %vm561, %v559, 0.0
        %v563 = vsel %vm561, %v560, 0.0
        %v564 = vadd.f32 %v562, %v563
        %565 = vadd.xlane.f32.xlu0 %v564
        %v566 = vpop.xlane.xlu0 %565
        %v567 = vrot.slane %v566, 4
        %v568 = vadd.f32 %v566, %v567
        %v569 = vrot.slane %v568, 2
        %v570 = vadd.f32 %v568, %v569
        %v571 = vrot.slane %v570, 1
        %v572 = vadd.f32 %v570, %v571
        %s573 = vtos %v572
        %v574 = vadd.f32 %v344, %v534
        %v575 = vadd.f32 %v345, %v539
        %576 = vst [vmem:[#allocation8] sm:$0xff] %v574
        %577 = vst [vmem:[#allocation8 + $0x8] sm:$0xff] %v575
        %v578 = vstv %s27
        %vm579 = vcmp.eq.s32.totalorder %v428, %v578
        %v580 = vld [vmem:[%s325] sm:$0xff]
        %v581 = vld [vmem:[%s325 + $0x8] sm:$0xff]
        %v582 = vsel %vm579, %v446, %v580
        %v583 = vsel %vm579, %v460, %v581
        %vm584 = vcmask 31744
        %585 = vst.msk [vmem:[%s325] sm:$0xff] %vm584, %v582
        %586 = vst.msk [vmem:[%s325 + $0x8] sm:$0xff] %vm584, %v583
        %v587 = vld [vmem:[%s330] sm:$0xff]
        %v588 = vstv %s573
        %v589 = vsel %vm579, %v588, %v587
        %590 = vst.msk [vmem:[%s330] sm:$0xff] %vm584, %v589
        %s591 = smul.u32 2, %s26
        %p592 = scmp.lt.s32.totalorder %s591, 1
        %s593 = scalar_select %p592, %s591, 1
        %s594 = smul.addr %s593, 8
        %s595 = scalar_lea.vmem %s4, %s594
        %p596 = scmp.lt.s32.totalorder %s26, 0
        %s597 = scalar_select %p596, %s26, 0
        %s598 = smul.addr %s597, 8
        %s599 = scalar_lea.vmem %s5, %s598
        // Predicated region
        $region49: #{tpu_custom_call.1} parent=31 // pred_check
          %p600 = pneg %p130
        $region50: #{tpu_custom_call.1} parent=31 // pred_check_branch
          %602 = sbr.rel (%p600) target = $region52
        $region51: #{tpu_custom_call.1} parent=31 // pred_region
          %s603 = smul.u32 2, %s26
          %s605 = ssub.s32 256, 256
          %606 = vsyncadd [#allocation4], %s605
          %s607 = smul.addr %s603, 128
          %s608 = scalar_lea.hbm %s3, %s607
          %s609 = sshll.u32 [#allocation8], 4
          %s610 = int_to_ptr.vmem [resolvable:$true] %s609
          %615 = dma.vmem_to_hbm [thread:$0]  %s610, 256, %s608, [#allocation4], 128, 128, 8
        $region52: #{tpu_custom_call.1} parent=31 // pred_fallthru
          _
        // Predicated region
        $region53: #{tpu_custom_call.1} parent=31 // pred_check
          %p616 = pneg %p156
        $region54: #{tpu_custom_call.1} parent=31 // pred_check_branch
          %618 = sbr.rel (%p616) target = $region56
        $region55: #{tpu_custom_call.1} parent=31 // pred_region
          %s619 = smul.u32 2, %s26
        $region56: #{tpu_custom_call.1} parent=31 // pred_fallthru
          _
        // Predicated region
        $region57: #{tpu_custom_call.1} parent=31 // pred_check
          %p620 = pneg %p182
        $region58: #{tpu_custom_call.1} parent=31 // pred_check_branch
          %622 = sbr.rel (%p620) target = $region60
        $region59: #{tpu_custom_call.1} parent=31 // pred_region
          _
        $region60: #{tpu_custom_call.1} parent=31 // pred_fallthru
          _
        // Predicated region
        $region61: #{tpu_custom_call.1} parent=31 // pred_check
          %p623 = pneg %p130
        $region62: #{tpu_custom_call.1} parent=31 // pred_check_branch
          %625 = sbr.rel (%p623) target = $region64
        $region63: #{tpu_custom_call.1} parent=31 // pred_region
          %626 = dma.done [#allocation4], 256
        $region64: #{tpu_custom_call.1} parent=31 // pred_fallthru
          _
        // Predicated region
        $region65: #{tpu_custom_call.1} parent=31 // pred_check
          %p627 = pneg %p156
        $region66: #{tpu_custom_call.1} parent=31 // pred_check_branch
          %629 = sbr.rel (%p627) target = $region68
        $region67: #{tpu_custom_call.1} parent=31 // pred_region
          %s630 = smul.u32 2, %s26
          %p631 = scmp.lt.s32.totalorder %s630, 1
          %s632 = scalar_select %p631, %s630, 1
          %s633 = smul.addr %s632, 8
          %s634 = scalar_lea.vmem %s4, %s633
        $region68: #{tpu_custom_call.1} parent=31 // pred_fallthru
          _
        // Predicated region
        $region69: #{tpu_custom_call.1} parent=31 // pred_check
          %p635 = pneg %p182
        $region70: #{tpu_custom_call.1} parent=31 // pred_check_branch
          %637 = sbr.rel (%p635) target = $region72
        $region71: #{tpu_custom_call.1} parent=31 // pred_region
          %p638 = scmp.lt.s32.totalorder %s26, 0
          %s639 = scalar_select %p638, %s26, 0
          %s640 = smul.addr %s639, 8
          %s641 = scalar_lea.vmem %s5, %s640
        $region72: #{tpu_custom_call.1} parent=31 // pred_fallthru
          _
      $region32: #{tpu_custom_call.1} parent=5 // pred_fallthru
        _
      %p642 = scmp.le.s32.totalorder 2, %s17
      // Predicated region
      $region73: #{tpu_custom_call.1} parent=5 // pred_check
        %p643 = pneg %p642
      $region74: #{tpu_custom_call.1} parent=5 // pred_check_branch
        %645 = sbr.rel (%p643) target = $region76
      $region75: #{tpu_custom_call.1} parent=5 // pred_region
        %s646 = ssub.s32 %s17, 2
      $region76: #{tpu_custom_call.1} parent=5 // pred_fallthru
        _
    $region6: #{tpu_custom_call.1} parent=1 // loop_footer
      %s21 = sadd.s32 1, %s17
    $region7: #{tpu_custom_call.1} parent=1 // loop_footer_branch
      %16 = sbr.rel target = $region3
    $region8: #{tpu_custom_call.1} parent=1 // loop_exit
      _
    %647 = vsyncpa [#allocation3], 1
    %s648 = scalar_lea.sflag [#allocation3], 1
    %649 = vsyncpa %s648, 1
    %650 = vsyncpa [#allocation6], 1
    %s651 = scalar_lea.sflag [#allocation6], 1
    %652 = vsyncpa %s651, 1
    %653 = vsyncpa [#allocation4], 1
    %s654 = scalar_lea.sflag [#allocation4], 1
    %655 = vsyncpa %s654, 1

</llo_original>
